<compile_context>
chip_gen: v5e
topology: v5e:2x2
jax: 0.10.0
libtpu: 0.0.40
codegen_flags: <defaults>
</compile_context>

<pallas_src>
import jax
import jax.numpy as jnp
from jax import lax
from jax.experimental import pallas as pl
from jax.experimental.pallas import tpu as pltpu


def _round_up(x, m):
    return ((x + m - 1) // m) * m


def ehr_kernel(value_ref, codes_ref, wcode_ref, wval_ref, bias_ref, out_ref):
    tb, seq = value_ref.shape
    vocab_p = wcode_ref.shape[0]

    codes = codes_ref[...]                                   # (TB, S) int32
    value = value_ref[...]                                   # (TB, S) f32

    # --- pooled one-hot counts: 2D compare-accumulate, unrolled over S ---
    vocab_ids = lax.broadcasted_iota(jnp.int32, (1, vocab_p), 1)        # (1, Vp)
    counts = jnp.zeros((tb, vocab_p), jnp.float32)
    for s in range(seq):                                     # S is small & static
        counts = counts + (codes[:, s:s + 1] == vocab_ids).astype(jnp.float32)

    # --- value sum over S (1/S already folded into W_val on the host) ---
    val_sum = jnp.sum(value, axis=1, keepdims=True)                     # (TB, 1)

    # --- fused affine head: one (TB, Vp) @ (Vp, Cp) matmul + rank-1 add ---
    logits = (jnp.dot(counts, wcode_ref[...], preferred_element_type=jnp.float32)
              + val_sum * wval_ref[...]
              + bias_ref[...])                                          # (TB, Cp)
    out_ref[...] = logits.astype(out_ref.dtype)


def _fold_params(params, seq_len):
    """Exact host-side fold of the affine chain (all f32)."""
    table = params["embed_table"]                 # (V, E)
    w_head = params["w_head"]                     # (E, C)
    w_code = (table @ params["w_post_x"] @ w_head) * (1.0 / seq_len)      # (V, C)
    w_val = (params["w_val"] @ params["w_post_v"] @ w_head) * (1.0 / seq_len)  # (1, C)
    b_fused = ((params["b_val"] @ params["w_post_v"] + params["b_post"]) @ w_head
               + params["b_head"])                                        # (1, C)
    return w_code, w_val, b_fused


def ehr_forward(value, codes, params, *, tb=None):
    """value: (B, S) f32, codes: (B, S) i32 -> logits (B, C) f32."""
    B, S = value.shape
    V, _ = params["embed_table"].shape
    C = params["w_head"].shape[1]

    # --- batch tile: >= 2 grid steps when possible (v7x dual TC), tb % 8 == 0 ---
    if tb is None:
        if B <= 8:
            tb = B
        else:
            tb = min(512, _round_up(pl.cdiv(B, 2), 8))
    b_pad = pl.cdiv(B, tb) * tb
    if b_pad != B:
        pad = b_pad - B
        value = jnp.pad(value, ((0, pad), (0, 0)))
        codes = jnp.pad(codes, ((0, pad), (0, 0)))

    # --- host-side weight fold + padding ---
    w_code, w_val, b_fused = _fold_params(params, S)

    # Vocab padded to a multiple of 128 (clean lanes / clean MXU K dim).
    vp = _round_up(V, 128)
    if vp != V:
        w_code = jnp.pad(w_code, ((0, vp - V), (0, 0)))

    # Class padding only when C is large enough for lane-dense stores to pay off.
    cp = _round_up(C, 128) if C >= 64 else C
    if cp != C:
        w_code = jnp.pad(w_code, ((0, 0), (0, cp - C)))
        w_val = jnp.pad(w_val, ((0, 0), (0, cp - C)))
        b_fused = jnp.pad(b_fused, ((0, 0), (0, cp - C)))

    grid = (b_pad // tb,)

    # --- explicit VMEM budget (double-buffered blocks + in-kernel temps) ---
    lane_c = max(cp, 128)
    est = (2 * 2 * tb * S * 4            # value + codes tiles, double-buffered
           + 2 * vp * lane_c * 4          # folded weight, double-buffered
           + 4 * 8 * lane_c * 4           # w_val / b_fused (sub-tile padded)
           + 2 * tb * lane_c * 4          # output block, double-buffered
           + 3 * tb * vp * 4)             # counts + compare temporaries
    vmem_limit = min(max(2 * est, 16 << 20), 64 << 20)

    out = pl.pallas_call(
        ehr_kernel,
        out_shape=jax.ShapeDtypeStruct((b_pad, cp), jnp.float32),
        grid_spec=pltpu.PrefetchScalarGridSpec(
            num_scalar_prefetch=0,
            grid=grid,
            in_specs=[
                pl.BlockSpec((tb, S), lambda b: (b, 0)),     # value
                pl.BlockSpec((tb, S), lambda b: (b, 0)),     # codes
                pl.BlockSpec((vp, cp), lambda b: (0, 0)),    # folded code weight
                pl.BlockSpec((1, cp), lambda b: (0, 0)),     # folded value weight
                pl.BlockSpec((1, cp), lambda b: (0, 0)),     # fused bias
            ],
            out_specs=pl.BlockSpec((tb, cp), lambda b: (b, 0)),
        ),
        compiler_params=pltpu.CompilerParams(
            dimension_semantics=("parallel",),
            vmem_limit_bytes=vmem_limit),
    )(value, codes, w_code, w_val, b_fused)
    return out[:B, :C]


def reference_forward(value, codes, params):
    x = params["embed_table"][codes]                                   # (B, S, E)
    val_emb = value[:, :, None] * params["w_val"][0][None, None, :] + params["b_val"][0]
    cat = jnp.concatenate([x, val_emb], axis=2)                        # (B, S, 2E)
    w_post = jnp.concatenate([params["w_post_x"], params["w_post_v"]], axis=0)
    h = jnp.einsum("bsf,fe->bse", cat, w_post) + params["b_post"][0]
    pooled = jnp.mean(h, axis=1)
    return pooled @ params["w_head"] + params["b_head"][0]


if __name__ == "__main__":
    S, E, C, V = 8, 32, 4, 50   # seq, pred_embed_dim, classes, vocab

    key = jax.random.PRNGKey(0)
    ks = jax.random.split(key, 12)

    params = {
        "embed_table": jax.random.normal(ks[0], (V, E), jnp.float32) * 0.1,
        "w_val":       jax.random.normal(ks[1], (1, E), jnp.float32) * 0.1,   # Linear(1, E)
        "b_val":       jax.random.normal(ks[2], (1, E), jnp.float32) * 0.01,
        "w_post_x":    jax.random.normal(ks[3], (E, E), jnp.float32) * 0.1,   # Linear(2E, E) split
        "w_post_v":    jax.random.normal(ks[4], (E, E), jnp.float32) * 0.1,
        "b_post":      jax.random.normal(ks[5], (1, E), jnp.float32) * 0.01,
        "w_head":      jax.random.normal(ks[6], (E, C), jnp.float32) * 0.1,   # pred head
        "b_head":      jax.random.normal(ks[7], (1, C), jnp.float32) * 0.01,
    }

    # Main check: small shapes (batch=2), single grid step.
    B = 2
    value = jax.random.normal(ks[8], (B, S), jnp.float32)
    codes = jax.random.randint(ks[9], (B, S), 0, V, dtype=jnp.int32)

    logits = jax.block_until_ready(ehr_forward(value, codes, params))
    ref = reference_forward(value, codes, params)
    assert logits.shape == (B, C)
    assert jnp.allclose(logits, ref, atol=1e-4, rtol=1e-4), (logits, ref)

    # Second check: default tb picks >= 2 grid steps + batch padding (B=12 -> tb=8, B_pad=16).
    B2 = 12
    value2 = jax.random.normal(ks[10], (B2, S), jnp.float32)
    codes2 = jax.random.randint(ks[11], (B2, S), 0, V, dtype=jnp.int32)
    logits2 = jax.block_until_ready(ehr_forward(value2, codes2, params))
    ref2 = reference_forward(value2, codes2, params)
    assert logits2.shape == (B2, C)
    assert jnp.allclose(logits2, ref2, atol=1e-4, rtol=1e-4), (logits2, ref2)

    print("KERNEL_OK")
</pallas_src>

<mosaic_0001>
module attributes {stable_mosaic.version = 11 : i64} {
  func.func @ehr_kernel(%arg0: i32, %arg1: memref<2x8xf32, #tpu.memory_space<vmem>>, %arg2: memref<2x8xi32, #tpu.memory_space<vmem>>, %arg3: memref<128x4xf32, #tpu.memory_space<vmem>>, %arg4: memref<1x4xf32, #tpu.memory_space<vmem>>, %arg5: memref<1x4xf32, #tpu.memory_space<vmem>>, %arg6: memref<2x4xf32, #tpu.memory_space<vmem>>) attributes {dimension_semantics = [#tpu.dimension_semantics<parallel>], iteration_bounds = array<i64: 1>, scalar_prefetch = 0 : i64, scratch_operands = 0 : i64, tpu.core_type = #tpu.core_type<tc>, window_params = [{transform_indices = @transform_0, window_bounds = array<i64: 2, 8>}, {transform_indices = @transform_1, window_bounds = array<i64: 2, 8>}, {pipeline_mode = #tpu.pipeline_mode<synchronous>, transform_indices = @transform_2, window_bounds = array<i64: 128, 4>}, {pipeline_mode = #tpu.pipeline_mode<synchronous>, transform_indices = @transform_3, window_bounds = array<i64: 1, 4>}, {pipeline_mode = #tpu.pipeline_mode<synchronous>, transform_indices = @transform_4, window_bounds = array<i64: 1, 4>}, {transform_indices = @transform_5, window_bounds = array<i64: 2, 4>}]} {
    %c0 = arith.constant 0 : index
    %c0_0 = arith.constant 0 : index
    %0 = vector.load %arg2[%c0, %c0_0] : memref<2x8xi32, #tpu.memory_space<vmem>>, vector<2x8xi32>
    %c0_1 = arith.constant 0 : index
    %c0_2 = arith.constant 0 : index
    %1 = vector.load %arg1[%c0_1, %c0_2] : memref<2x8xf32, #tpu.memory_space<vmem>>, vector<2x8xf32>
    %2 = tpu.iota {dimensions = array<i32: 1>} : vector<1x128xi32>
    %cst = arith.constant 0.000000e+00 : f32
    %3 = vector.broadcast %cst : f32 to vector<2x128xf32>
    %4 = vector.extract_strided_slice %0 {offsets = [0, 0], sizes = [2, 1], strides = [1, 1]} : vector<2x8xi32> to vector<2x1xi32>
    %5 = vector.broadcast %4 : vector<2x1xi32> to vector<2x128xi32>
    %6 = vector.broadcast %2 : vector<1x128xi32> to vector<2x128xi32>
    %7 = arith.cmpi eq, %5, %6 : vector<2x128xi32>
    %8 = arith.extui %7 : vector<2x128xi1> to vector<2x128xi32>
    %9 = arith.sitofp %8 : vector<2x128xi32> to vector<2x128xf32>
    %10 = arith.addf %3, %9 : vector<2x128xf32>
    %11 = vector.extract_strided_slice %0 {offsets = [0, 1], sizes = [2, 1], strides = [1, 1]} : vector<2x8xi32> to vector<2x1xi32>
    %12 = vector.broadcast %11 : vector<2x1xi32> to vector<2x128xi32>
    %13 = vector.broadcast %2 : vector<1x128xi32> to vector<2x128xi32>
    %14 = arith.cmpi eq, %12, %13 : vector<2x128xi32>
    %15 = arith.extui %14 : vector<2x128xi1> to vector<2x128xi32>
    %16 = arith.sitofp %15 : vector<2x128xi32> to vector<2x128xf32>
    %17 = arith.addf %10, %16 : vector<2x128xf32>
    %18 = vector.extract_strided_slice %0 {offsets = [0, 2], sizes = [2, 1], strides = [1, 1]} : vector<2x8xi32> to vector<2x1xi32>
    %19 = vector.broadcast %18 : vector<2x1xi32> to vector<2x128xi32>
    %20 = vector.broadcast %2 : vector<1x128xi32> to vector<2x128xi32>
    %21 = arith.cmpi eq, %19, %20 : vector<2x128xi32>
    %22 = arith.extui %21 : vector<2x128xi1> to vector<2x128xi32>
    %23 = arith.sitofp %22 : vector<2x128xi32> to vector<2x128xf32>
    %24 = arith.addf %17, %23 : vector<2x128xf32>
    %25 = vector.extract_strided_slice %0 {offsets = [0, 3], sizes = [2, 1], strides = [1, 1]} : vector<2x8xi32> to vector<2x1xi32>
    %26 = vector.broadcast %25 : vector<2x1xi32> to vector<2x128xi32>
    %27 = vector.broadcast %2 : vector<1x128xi32> to vector<2x128xi32>
    %28 = arith.cmpi eq, %26, %27 : vector<2x128xi32>
    %29 = arith.extui %28 : vector<2x128xi1> to vector<2x128xi32>
    %30 = arith.sitofp %29 : vector<2x128xi32> to vector<2x128xf32>
    %31 = arith.addf %24, %30 : vector<2x128xf32>
    %32 = vector.extract_strided_slice %0 {offsets = [0, 4], sizes = [2, 1], strides = [1, 1]} : vector<2x8xi32> to vector<2x1xi32>
    %33 = vector.broadcast %32 : vector<2x1xi32> to vector<2x128xi32>
    %34 = vector.broadcast %2 : vector<1x128xi32> to vector<2x128xi32>
    %35 = arith.cmpi eq, %33, %34 : vector<2x128xi32>
    %36 = arith.extui %35 : vector<2x128xi1> to vector<2x128xi32>
    %37 = arith.sitofp %36 : vector<2x128xi32> to vector<2x128xf32>
    %38 = arith.addf %31, %37 : vector<2x128xf32>
    %39 = vector.extract_strided_slice %0 {offsets = [0, 5], sizes = [2, 1], strides = [1, 1]} : vector<2x8xi32> to vector<2x1xi32>
    %40 = vector.broadcast %39 : vector<2x1xi32> to vector<2x128xi32>
    %41 = vector.broadcast %2 : vector<1x128xi32> to vector<2x128xi32>
    %42 = arith.cmpi eq, %40, %41 : vector<2x128xi32>
    %43 = arith.extui %42 : vector<2x128xi1> to vector<2x128xi32>
    %44 = arith.sitofp %43 : vector<2x128xi32> to vector<2x128xf32>
    %45 = arith.addf %38, %44 : vector<2x128xf32>
    %46 = vector.extract_strided_slice %0 {offsets = [0, 6], sizes = [2, 1], strides = [1, 1]} : vector<2x8xi32> to vector<2x1xi32>
    %47 = vector.broadcast %46 : vector<2x1xi32> to vector<2x128xi32>
    %48 = vector.broadcast %2 : vector<1x128xi32> to vector<2x128xi32>
    %49 = arith.cmpi eq, %47, %48 : vector<2x128xi32>
    %50 = arith.extui %49 : vector<2x128xi1> to vector<2x128xi32>
    %51 = arith.sitofp %50 : vector<2x128xi32> to vector<2x128xf32>
    %52 = arith.addf %45, %51 : vector<2x128xf32>
    %53 = vector.extract_strided_slice %0 {offsets = [0, 7], sizes = [2, 1], strides = [1, 1]} : vector<2x8xi32> to vector<2x1xi32>
    %54 = vector.broadcast %53 : vector<2x1xi32> to vector<2x128xi32>
    %55 = vector.broadcast %2 : vector<1x128xi32> to vector<2x128xi32>
    %56 = arith.cmpi eq, %54, %55 : vector<2x128xi32>
    %57 = arith.extui %56 : vector<2x128xi1> to vector<2x128xi32>
    %58 = arith.sitofp %57 : vector<2x128xi32> to vector<2x128xf32>
    %59 = arith.addf %52, %58 : vector<2x128xf32>
    %cst_3 = arith.constant dense<0.000000e+00> : vector<2xf32>
    %60 = vector.multi_reduction <add>, %1, %cst_3 [1] : vector<2x8xf32> to vector<2xf32>
    %61 = vector.shape_cast %60 : vector<2xf32> to vector<2x1xf32>
    %c0_4 = arith.constant 0 : index
    %c0_5 = arith.constant 0 : index
    %62 = vector.load %arg3[%c0_4, %c0_5] : memref<128x4xf32, #tpu.memory_space<vmem>>, vector<128x4xf32>
    %cst_6 = arith.constant dense<0.000000e+00> : vector<2x4xf32>
    %63 = tpu.matmul %59, %62, %cst_6 {dimension_numbers = #tpu.dot_dimension_numbers<[1], [0], [0], [1], [0, 0, 1, 1], [], []>} : vector<2x128xf32>, vector<128x4xf32>, vector<2x4xf32> -> vector<2x4xf32>
    %c0_7 = arith.constant 0 : index
    %c0_8 = arith.constant 0 : index
    %64 = vector.load %arg4[%c0_7, %c0_8] : memref<1x4xf32, #tpu.memory_space<vmem>>, vector<1x4xf32>
    %65 = vector.broadcast %61 : vector<2x1xf32> to vector<2x4xf32>
    %66 = vector.broadcast %64 : vector<1x4xf32> to vector<2x4xf32>
    %67 = arith.mulf %65, %66 : vector<2x4xf32>
    %68 = arith.addf %63, %67 : vector<2x4xf32>
    %c0_9 = arith.constant 0 : index
    %c0_10 = arith.constant 0 : index
    %69 = vector.load %arg5[%c0_9, %c0_10] : memref<1x4xf32, #tpu.memory_space<vmem>>, vector<1x4xf32>
    %70 = vector.broadcast %69 : vector<1x4xf32> to vector<2x4xf32>
    %71 = arith.addf %68, %70 : vector<2x4xf32>
    %c0_11 = arith.constant 0 : index
    %c0_12 = arith.constant 0 : index
    %72 = vector.load %arg6[%c0_11, %c0_12] : memref<2x4xf32, #tpu.memory_space<vmem>>, vector<2x4xf32>
    tpu.vector_store %arg6[%c0_11, %c0_12], %71 {strides = array<i32>} : memref<2x4xf32, #tpu.memory_space<vmem>>, vector<2x4xf32>,
    return
  }
  func.func @transform_0(%arg0: i32) -> (i32, i32) {
    %c0_i32 = arith.constant 0 : i32
    %c0_i32_0 = arith.constant 0 : i32
    return %arg0, %c0_i32 : i32, i32
  }
  func.func @transform_1(%arg0: i32) -> (i32, i32) {
    %c0_i32 = arith.constant 0 : i32
    %c0_i32_0 = arith.constant 0 : i32
    return %arg0, %c0_i32 : i32, i32
  }
  func.func @transform_2(%arg0: i32) -> (i32, i32) {
    %c0_i32 = arith.constant 0 : i32
    %c0_i32_0 = arith.constant 0 : i32
    %c0_i32_1 = arith.constant 0 : i32
    return %c0_i32, %c0_i32_0 : i32, i32
  }
  func.func @transform_3(%arg0: i32) -> (i32, i32) {
    %c0_i32 = arith.constant 0 : i32
    %c0_i32_0 = arith.constant 0 : i32
    %c0_i32_1 = arith.constant 0 : i32
    return %c0_i32, %c0_i32_0 : i32, i32
  }
  func.func @transform_4(%arg0: i32) -> (i32, i32) {
    %c0_i32 = arith.constant 0 : i32
    %c0_i32_0 = arith.constant 0 : i32
    %c0_i32_1 = arith.constant 0 : i32
    return %c0_i32, %c0_i32_0 : i32, i32
  }
  func.func @transform_5(%arg0: i32) -> (i32, i32) {
    %c0_i32 = arith.constant 0 : i32
    %c0_i32_0 = arith.constant 0 : i32
    return %arg0, %c0_i32 : i32, i32
  }
}

</mosaic_0001>

<llo_original>
// kernel: tpu_custom_call.1
$region0: #{tpu_custom_call.1}
  #allocation0 [shape = 'u32[]', space=smem, size = 0x4, offset = 0x4, fixed_abs, tag = 'smem constant byte address 0x4 - core index']
  #allocation1 [shape = 'u32[72,128]{1,0:T(1,128)}', space=vmem, size = 0x9000, scoped, tag = 'internal scratch']
  %s0 = inlined_call_operand.vmem [shape: f32[2,8], index: 0, kind: input, shape index: {}]
  %s1 = inlined_call_operand.vmem [shape: s32[2,8], index: 1, kind: input, shape index: {}]
  %s2 = inlined_call_operand.vmem [shape: f32[128,4], index: 2, kind: input, shape index: {}]
  %s3 = inlined_call_operand.vmem [shape: f32[1,4], index: 3, kind: input, shape index: {}]
  %s4 = inlined_call_operand.vmem [shape: f32[1,4], index: 4, kind: input, shape index: {}]
  %s5 = inlined_call_operand.hbm [shape: f32[2,4], index: 5, kind: output, shape index: {}]
  %s6 = sld [smem:[#allocation0]]
  $region30: #{tpu_custom_call.1} parent=0
    _
  %s8 = ssub.s32 1, %s6
  %s9 = scalar_select 0, %s8, %s6
  $region1: #{tpu_custom_call.1} parent=0
    #allocation2 [shape = 'u8[1024]{0}', space=vmem, size = 0x400, scoped, tag = 'output window, operand 0, single buffered']
    #allocation3 [shape = 's32[1]{0}', space=sflag, size = 0x4, scoped, tag = 'scoped memory for tpu_custom_call.1']
    %10 = vsyncpa [#allocation3], 0
    // Predicated region
    $region2: #{tpu_custom_call.1} parent=1 // pred_check
      _
    $region3: #{tpu_custom_call.1} parent=1 // pred_check_branch
      %12 = sbr.rel (0) target = $region5
    $region4: #{tpu_custom_call.1} parent=1 // pred_region
      _
    $region5: #{tpu_custom_call.1} parent=1 // pred_fallthru
      _
    // Predicated region
    $region6: #{tpu_custom_call.1} parent=1 // pred_check
      _
    $region7: #{tpu_custom_call.1} parent=1 // pred_check_branch
      %14 = sbr.rel (0) target = $region9
    $region8: #{tpu_custom_call.1} parent=1 // pred_region
      _
    $region9: #{tpu_custom_call.1} parent=1 // pred_fallthru
      _
    // Predicated region
    $region10: #{tpu_custom_call.1} parent=1 // pred_check
      _
    $region11: #{tpu_custom_call.1} parent=1 // pred_check_branch
      %16 = sbr.rel (0) target = $region13
    $region12: #{tpu_custom_call.1} parent=1 // pred_region
      _
    $region13: #{tpu_custom_call.1} parent=1 // pred_fallthru
      _
    // Predicated region
    $region14: #{tpu_custom_call.1} parent=1 // pred_check
      _
    $region15: #{tpu_custom_call.1} parent=1 // pred_check_branch
      %18 = sbr.rel (0) target = $region17
    $region16: #{tpu_custom_call.1} parent=1 // pred_region
      _
    $region17: #{tpu_custom_call.1} parent=1 // pred_fallthru
      _
    // Predicated region
    $region18: #{tpu_custom_call.1} parent=1 // pred_check
      _
    $region19: #{tpu_custom_call.1} parent=1 // pred_check_branch
      %20 = sbr.rel (0) target = $region21
    $region20: #{tpu_custom_call.1} parent=1 // pred_region
      _
    $region21: #{tpu_custom_call.1} parent=1 // pred_fallthru
      _
    %v21 = vld [vmem:[%s1] sm:$0x3]
    %v22 = vld [vmem:[%s0] sm:$0x3]
    %v23 = vlaneseq
    %v24 = vand.u32 %v23, 127
    %25 = vset.pattern.permute.xlu0 0
    %26 = vperm.xlu0 %25, %v21
    %v27 = vpop.permute.xlu0 %26
    %vm28 = vcmp.eq.s32.totalorder %v27, %v24
    %v29 = vsel %vm28, 1, 0
    %v30 = vcvt.s32.f32 %v29
    %v31 = vadd.f32 %v30, 0.0
    %32 = vset.pattern.permute.xlu0 1
    %33 = vperm.xlu0 %32, %v21
    %v34 = vpop.permute.xlu0 %33
    %vm35 = vcmp.eq.s32.totalorder %v34, %v24
    %v36 = vsel %vm35, 1, 0
    %v37 = vcvt.s32.f32 %v36
    %v38 = vadd.f32 %v31, %v37
    %39 = vset.pattern.permute.xlu0 2
    %40 = vperm.xlu0 %39, %v21
    %v41 = vpop.permute.xlu0 %40
    %vm42 = vcmp.eq.s32.totalorder %v41, %v24
    %v43 = vsel %vm42, 1, 0
    %v44 = vcvt.s32.f32 %v43
    %v45 = vadd.f32 %v38, %v44
    %46 = vset.pattern.permute.xlu0 3
    %47 = vperm.xlu0 %46, %v21
    %v48 = vpop.permute.xlu0 %47
    %vm49 = vcmp.eq.s32.totalorder %v48, %v24
    %v50 = vsel %vm49, 1, 0
    %v51 = vcvt.s32.f32 %v50
    %v52 = vadd.f32 %v45, %v51
    %53 = vset.pattern.permute.xlu0 4
    %54 = vperm.xlu0 %53, %v21
    %v55 = vpop.permute.xlu0 %54
    %vm56 = vcmp.eq.s32.totalorder %v55, %v24
    %v57 = vsel %vm56, 1, 0
    %v58 = vcvt.s32.f32 %v57
    %v59 = vadd.f32 %v52, %v58
    %60 = vset.pattern.permute.xlu0 5
    %61 = vperm.xlu0 %60, %v21
    %v62 = vpop.permute.xlu0 %61
    %vm63 = vcmp.eq.s32.totalorder %v62, %v24
    %v64 = vsel %vm63, 1, 0
    %v65 = vcvt.s32.f32 %v64
    %v66 = vadd.f32 %v59, %v65
    %67 = vset.pattern.permute.xlu0 6
    %68 = vperm.xlu0 %67, %v21
    %v69 = vpop.permute.xlu0 %68
    %vm70 = vcmp.eq.s32.totalorder %v69, %v24
    %v71 = vsel %vm70, 1, 0
    %v72 = vcvt.s32.f32 %v71
    %v73 = vadd.f32 %v66, %v72
    %74 = vset.pattern.permute.xlu0 7
    %75 = vperm.xlu0 %74, %v21
    %v76 = vpop.permute.xlu0 %75
    %vm77 = vcmp.eq.s32.totalorder %v76, %v24
    %v78 = vsel %vm77, 1, 0
    %v79 = vcvt.s32.f32 %v78
    %v80 = vadd.f32 %v73, %v79
    %vm81 = vcmask 58368
    %v82 = vsel %vm81, %v22, 0.0
    %83 = vadd.xlane.f32.xlu0 %v82
    %v84 = vpop.xlane.xlu0 %83
    %v85 = vld [vmem:[%s2] sm:$0xff]
    %v86 = vld [vmem:[%s2 + $0x8] sm:$0xff]
    %v87 = vld [vmem:[%s2 + $0x10] sm:$0xff]
    %v88 = vld [vmem:[%s2 + $0x18] sm:$0xff]
    %v89 = vld [vmem:[%s2 + $0x20] sm:$0xff]
    %v90 = vld [vmem:[%s2 + $0x28] sm:$0xff]
    %v91 = vld [vmem:[%s2 + $0x30] sm:$0xff]
    %v92 = vld [vmem:[%s2 + $0x38] sm:$0xff]
    %v93 = vld [vmem:[%s2 + $0x40] sm:$0xff]
    %v94 = vld [vmem:[%s2 + $0x48] sm:$0xff]
    %v95 = vld [vmem:[%s2 + $0x50] sm:$0xff]
    %v96 = vld [vmem:[%s2 + $0x58] sm:$0xff]
    %v97 = vld [vmem:[%s2 + $0x60] sm:$0xff]
    %v98 = vld [vmem:[%s2 + $0x68] sm:$0xff]
    %v99 = vld [vmem:[%s2 + $0x70] sm:$0xff]
    %v100 = vld [vmem:[%s2 + $0x78] sm:$0xff]
    %v101 = vld [vmem:[%s3] sm:$0x1]
    %v103 = vperm.slane %v101, 0
    %v105 = vmul.f32 %v84, %v103
    %106 = vmatpush.msra.mxu0 %v100
    %107 = vmatpush.msra.mxu0 %v99
    %108 = vmatpush.msra.mxu0 %v98
    %109 = vmatpush.msra.mxu0 %v97
    %110 = vmatpush.msra.mxu0 %v96
    %111 = vmatpush.msra.mxu0 %v95
    %112 = vmatpush.msra.mxu0 %v94
    %113 = vmatpush.msra.mxu0 %v93
    %114 = vmatpush.msra.mxu0 %v92
    %115 = vmatpush.msra.mxu0 %v91
    %116 = vmatpush.msra.mxu0 %v90
    %117 = vmatpush.msra.mxu0 %v89
    %118 = vmatpush.msra.mxu0 %v88
    %119 = vmatpush.msra.mxu0 %v87
    %120 = vmatpush.msra.mxu0 %v86
    %121 = vmatpush.msra.mxu0 %v85
    %122 = vmatmul.f32.gmra.mxu0 %v80
    %v123 = vpop.f32.mrf.mxu0
    %v124 = vadd.f32 %v105, %v123
    %125 = vdwg.mxu0
    %v126 = vld [vmem:[%s4] sm:$0x1]
    %v128 = vperm.slane %v126, 0
    %v130 = vadd.f32 %v124, %v128
    %vm131 = vcmask 25600
    %132 = vst.msk [vmem:[#allocation2] sm:$0x3] %vm131, %v130
    // Predicated region
    $region22: #{tpu_custom_call.1} parent=1 // pred_check
      _
    $region23: #{tpu_custom_call.1} parent=1 // pred_check_branch
      %134 = sbr.rel (0) target = $region25
    $region24: #{tpu_custom_call.1} parent=1 // pred_region
      %136 = vsyncadd [#allocation3], 0
      %s138 = sshll.u32 [#allocation2], 4
      %s139 = int_to_ptr.vmem [resolvable:$true] %s138
      %s140 = sshll.u32 %s5, 4
      %s141 = int_to_ptr.hbm [resolvable:$true] %s140
      %143 = dma.vmem_to_hbm [thread:$0]  %s139, 32, %s141, [#allocation3]
    $region25: #{tpu_custom_call.1} parent=1 // pred_fallthru
      _
    // Predicated region
    $region26: #{tpu_custom_call.1} parent=1 // pred_check
      _
    $region27: #{tpu_custom_call.1} parent=1 // pred_check_branch
      %145 = sbr.rel (0) target = $region29
    $region28: #{tpu_custom_call.1} parent=1 // pred_region
      %147 = dma.done [#allocation3], 32
    $region29: #{tpu_custom_call.1} parent=1 // pred_fallthru
      _
    %148 = vsyncpa [#allocation3], 1

</llo_original>
